<compile_context>
chip_gen: v5e
topology: v5e:2x2
jax: 0.10.0
libtpu: 0.0.40
codegen_flags: <defaults>
</compile_context>

<pallas_src>
import math

import jax
import jax.numpy as jnp
from jax import lax
from jax.experimental import pallas as pl
from jax.experimental.pallas import tpu as pltpu


_INV_SQRT2 = 1.0 / math.sqrt(2.0)


def _gelu_exact(x):
    # PyTorch nn.GELU() default = exact erf formulation (fp32 math).
    return 0.5 * x * (1.0 + lax.erf(x * _INV_SQRT2))


# ----------------------------------------------------------------------------
# Kernels
# ----------------------------------------------------------------------------
def mlp_resident_kernel(x_ref, w1_ref, b1_ref, w2_ref, b2_ref, o_ref):
    """Grid = (row tiles,). w1/w2 blocks are full-size with constant index maps
    -> DMA'd once and VMEM-resident across all row tiles."""
    h = jnp.dot(x_ref[...], w1_ref[...], preferred_element_type=jnp.float32)
    h = h + b1_ref[...]                                  # fp32 bias add
    g = _gelu_exact(h)                                   # fp32 GELU (exact erf)
    y = jnp.dot(g.astype(jnp.bfloat16), w2_ref[...],
                preferred_element_type=jnp.float32)
    o_ref[...] = y + b2_ref[...]


def mlp_tiled_kernel(x_ref, w1_ref, b1_ref, w2_ref, b2_ref, o_ref):
    """Grid = (row tiles, hidden tiles).  Hidden axis is the reduction axis; the
    f32 output block (constant index over j) is the accumulator (P3 pattern)."""
    j = pl.program_id(1)

    @pl.when(j == 0)
    def _():
        o_ref[...] = jnp.zeros_like(o_ref)

    h = jnp.dot(x_ref[...], w1_ref[...], preferred_element_type=jnp.float32)
    h = h + b1_ref[...]
    g = _gelu_exact(h)
    o_ref[...] += jnp.dot(g.astype(jnp.bfloat16), w2_ref[...],
                          preferred_element_type=jnp.float32)

    @pl.when(j == pl.num_programs(1) - 1)
    def _():
        o_ref[...] = o_ref[...] + b2_ref[...]


# ----------------------------------------------------------------------------
# Planning helpers (all static Python at trace time)
# ----------------------------------------------------------------------------
def _round_up(n, m):
    return ((n + m - 1) // m) * m


def _resident_bytes(tm, C, H):
    weights = 2 * (4 * C * H) + 2 * 4 * (H + C)    # (double-buffered) bf16 w1+w2, f32 biases
    io = 2 * tm * C * 2 + 2 * tm * C * 4           # double-buffered x (bf16) + out (f32)
    inter = 10 * tm * H                            # h/g fp32 + bf16 copy of g (~2.5 * 4 B)
    return weights + io + inter


def _tiled_bytes(tm, th, C, H):
    blocks = (2 * tm * C * 2                       # x block (bf16)
              + 2 * C * th * 2                     # w1 tile (bf16)
              + 2 * th * C * 2                     # w2 tile (bf16)
              + 2 * tm * C * 4                     # out block (f32)
              + 2 * (th + C) * 4)                  # bias slices
    inter = 10 * tm * th                           # h/g fp32 + bf16 copy of g
    return blocks + inter


def _plan(M, C, H):
    try:
        vmem_cap = int(pltpu.get_tpu_info().vmem_capacity_bytes)
    except Exception:
        vmem_cap = 64 * 1024 * 1024                # conservative fallback (v7x per-TC)
    budget = (vmem_cap * 3) // 4                   # ~25% headroom for compiler scratch
    vmem_limit = min((vmem_cap * 4) // 5, 112 * 1024 * 1024)

    M8 = _round_up(max(M, 1), 8)

    # Plan A: weights fully VMEM-resident (loaded once); grid over rows only.
    tm = max(8, (min(512, M8) // 8) * 8)
    while tm > 8 and _resident_bytes(tm, C, H) > budget:
        tm = max(8, ((tm // 2) // 8) * 8)
    if _resident_bytes(tm, C, H) <= budget:
        return dict(kind="resident", tm=tm, th=H, vmem_limit=vmem_limit)

    # Plan B: hidden-axis reduction; large row tile amortizes weight streaming
    # (arith intensity vs weights = tm FLOP/byte).
    th_opts = [t for t in (1024, 512, 256, 128) if H % t == 0] or [H]
    tm_opts = [t for t in (2048, 1024, 512, 256, 128, 64, 32, 16, 8) if t <= M8] or [8]
    for tm_c in tm_opts:
        for th_c in th_opts:
            if _tiled_bytes(tm_c, th_c, C, H) <= budget:
                return dict(kind="tiled", tm=tm_c, th=th_c, vmem_limit=vmem_limit)
    return dict(kind="tiled", tm=tm_opts[-1], th=th_opts[-1], vmem_limit=vmem_limit)


# ----------------------------------------------------------------------------
# Wrapper
# ----------------------------------------------------------------------------
def mlp_forward(x, params):
    """x: (..., C).  params: w1 (C,4C) bf16, b1 (1,4C) f32, w2 (4C,C) bf16, b2 (1,C) f32."""
    orig_shape = x.shape
    orig_dtype = x.dtype
    C = int(orig_shape[-1])
    M = 1
    for d in orig_shape[:-1]:
        M *= int(d)

    w1 = params["w1"].astype(jnp.bfloat16)      # (C, H)  pre-transposed (in, out)
    b1 = params["b1"].astype(jnp.float32)       # (1, H)
    w2 = params["w2"].astype(jnp.bfloat16)      # (H, C)
    b2 = params["b2"].astype(jnp.float32)       # (1, C)
    H = int(w1.shape[1])

    plan = _plan(M, C, H)
    tm, th = plan["tm"], plan["th"]
    M_pad = _round_up(M, tm)

    # bf16 feed: cast once here, not per hidden tile inside the kernel.
    x2 = x.reshape(M, C).astype(jnp.bfloat16)
    if M_pad != M:
        x2 = jnp.pad(x2, ((0, M_pad - M), (0, 0)))

    n_row = M_pad // tm
    flops = 4 * M_pad * C * H                   # two matmuls, 2*M*C*H each
    trans = M_pad * H                           # erf in GELU

    if plan["kind"] == "resident":
        grid = (n_row,)
        in_specs = [
            pl.BlockSpec((tm, C), lambda i: (i, 0)),     # x row tile
            pl.BlockSpec((C, H), lambda i: (0, 0)),      # w1: resident, DMA'd once
            pl.BlockSpec((1, H), lambda i: (0, 0)),      # b1
            pl.BlockSpec((H, C), lambda i: (0, 0)),      # w2: resident, DMA'd once
            pl.BlockSpec((1, C), lambda i: (0, 0)),      # b2
        ]
        out_specs = pl.BlockSpec((tm, C), lambda i: (i, 0))
        kernel = mlp_resident_kernel
        dims = ("parallel",)
        bytes_accessed = (M_pad * C * 2 + 4 * C * H + 4 * (H + C) + M_pad * C * 4)
    else:
        grid = (n_row, H // th)
        in_specs = [
            pl.BlockSpec((tm, C), lambda i, j: (i, 0)),  # x rows (const over j)
            pl.BlockSpec((C, th), lambda i, j: (0, j)),  # w1 column tile
            pl.BlockSpec((1, th), lambda i, j: (0, j)),  # b1 slice
            pl.BlockSpec((th, C), lambda i, j: (j, 0)),  # w2 row tile
            pl.BlockSpec((1, C), lambda i, j: (0, 0)),   # b2
        ]
        out_specs = pl.BlockSpec((tm, C), lambda i, j: (i, 0))
        kernel = mlp_tiled_kernel
        dims = ("parallel", "arbitrary")
        bytes_accessed = (M_pad * C * 2                       # x (bf16)
                          + n_row * (4 * C * H + 4 * H)       # weights+b1 re-streamed per row tile
                          + 4 * C                             # b2
                          + M_pad * C * 4)                    # out (f32)

    out = pl.pallas_call(
        kernel,
        out_shape=jax.ShapeDtypeStruct((M_pad, C), jnp.float32),
        grid_spec=pltpu.PrefetchScalarGridSpec(
            num_scalar_prefetch=0,
            grid=grid,
            in_specs=in_specs,
            out_specs=out_specs,
        ),
        compiler_params=pltpu.CompilerParams(
            dimension_semantics=dims,
            vmem_limit_bytes=int(plan["vmem_limit"]),
        ),
        cost_estimate=pl.CostEstimate(
            flops=int(flops),
            transcendentals=int(trans),
            bytes_accessed=int(bytes_accessed),
        ),
    )(x2, w1, b1, w2, b2)

    out = out[:M].astype(orig_dtype)
    return out.reshape(orig_shape)


# ----------------------------------------------------------------------------
# Params / reference
# ----------------------------------------------------------------------------
def init_params(key, n_embd):
    k1, k2 = jax.random.split(key)
    s = 0.02
    H = 4 * n_embd
    return {
        # Pre-transposed (in_features, out_features); weights stored bf16 for the MXU.
        "w1": (s * jax.random.normal(k1, (n_embd, H), jnp.float32)).astype(jnp.bfloat16),
        "b1": jnp.zeros((1, H), jnp.float32),
        "w2": (s * jax.random.normal(k2, (H, n_embd), jnp.float32)).astype(jnp.bfloat16),
        "b2": jnp.zeros((1, n_embd), jnp.float32),
    }


def reference_mlp(x, p):
    # Pure-JAX fp32 reference (eval-mode dropout = identity).
    w1 = p["w1"].astype(jnp.float32)
    w2 = p["w2"].astype(jnp.float32)
    h = x @ w1 + p["b1"]
    g = jax.nn.gelu(h, approximate=False)
    return g @ w2 + p["b2"]


if __name__ == "__main__":
    B, T, C = 2, 8, 32            # hidden = 4*C = 128 (lane-aligned), M = 16 rows
    key = jax.random.PRNGKey(0)
    kx, kp = jax.random.split(key)
    x = jax.random.normal(kx, (B, T, C), jnp.float32)
    params = init_params(kp, C)

    out = jax.jit(mlp_forward)(x, params)
    out = jax.block_until_ready(out)

    ref = reference_mlp(x, params)
    assert out.shape == (B, T, C)
    assert out.dtype == x.dtype
    max_err = float(jnp.max(jnp.abs(out - ref)))
    # bf16 inputs/weights on the MXU with fp32 accumulation -> relaxed tolerance.
    assert jnp.allclose(out, ref, atol=5e-3, rtol=2e-2), max_err
    print("KERNEL_OK")
</pallas_src>

<mosaic_0001>
module attributes {stable_mosaic.version = 11 : i64} {
  func.func @mlp_resident_kernel(%arg0: i32, %arg1: memref<16x32xbf16, #tpu.memory_space<vmem>>, %arg2: memref<32x128xbf16, #tpu.memory_space<vmem>>, %arg3: memref<1x128xf32, #tpu.memory_space<vmem>>, %arg4: memref<128x32xbf16, #tpu.memory_space<vmem>>, %arg5: memref<1x32xf32, #tpu.memory_space<vmem>>, %arg6: memref<16x32xf32, #tpu.memory_space<vmem>>) attributes {dimension_semantics = [#tpu.dimension_semantics<parallel>], iteration_bounds = array<i64: 1>, scalar_prefetch = 0 : i64, scratch_operands = 0 : i64, tpu.core_type = #tpu.core_type<tc>, window_params = [{transform_indices = @transform_0, window_bounds = array<i64: 16, 32>}, {pipeline_mode = #tpu.pipeline_mode<synchronous>, transform_indices = @transform_1, window_bounds = array<i64: 32, 128>}, {pipeline_mode = #tpu.pipeline_mode<synchronous>, transform_indices = @transform_2, window_bounds = array<i64: 1, 128>}, {pipeline_mode = #tpu.pipeline_mode<synchronous>, transform_indices = @transform_3, window_bounds = array<i64: 128, 32>}, {pipeline_mode = #tpu.pipeline_mode<synchronous>, transform_indices = @transform_4, window_bounds = array<i64: 1, 32>}, {transform_indices = @transform_5, window_bounds = array<i64: 16, 32>}]} {
    %c0 = arith.constant 0 : index
    %c0_0 = arith.constant 0 : index
    %0 = vector.load %arg1[%c0, %c0_0] : memref<16x32xbf16, #tpu.memory_space<vmem>>, vector<16x32xbf16>
    %c0_1 = arith.constant 0 : index
    %c0_2 = arith.constant 0 : index
    %1 = vector.load %arg2[%c0_1, %c0_2] : memref<32x128xbf16, #tpu.memory_space<vmem>>, vector<32x128xbf16>
    %cst = arith.constant dense<0.000000e+00> : vector<16x128xf32>
    %2 = tpu.matmul %0, %1, %cst {dimension_numbers = #tpu.dot_dimension_numbers<[1], [0], [0], [1], [0, 0, 1, 1], [], []>} : vector<16x32xbf16>, vector<32x128xbf16>, vector<16x128xf32> -> vector<16x128xf32>
    %c0_3 = arith.constant 0 : index
    %c0_4 = arith.constant 0 : index
    %3 = vector.load %arg3[%c0_3, %c0_4] : memref<1x128xf32, #tpu.memory_space<vmem>>, vector<1x128xf32>
    %4 = vector.broadcast %3 : vector<1x128xf32> to vector<16x128xf32>
    %5 = arith.addf %2, %4 : vector<16x128xf32>
    %cst_5 = arith.constant 5.000000e-01 : f32
    %6 = vector.broadcast %cst_5 : f32 to vector<16x128xf32>
    %7 = arith.mulf %6, %5 : vector<16x128xf32>
    %cst_6 = arith.constant 0.707106769 : f32
    %8 = vector.broadcast %cst_6 : f32 to vector<16x128xf32>
    %9 = arith.mulf %5, %8 : vector<16x128xf32>
    %10 = math.erf %9 : vector<16x128xf32>
    %cst_7 = arith.constant 1.000000e+00 : f32
    %11 = vector.broadcast %cst_7 : f32 to vector<16x128xf32>
    %12 = arith.addf %11, %10 : vector<16x128xf32>
    %13 = arith.mulf %7, %12 : vector<16x128xf32>
    %14 = arith.truncf %13 : vector<16x128xf32> to vector<16x128xbf16>
    %c0_8 = arith.constant 0 : index
    %c0_9 = arith.constant 0 : index
    %15 = vector.load %arg4[%c0_8, %c0_9] : memref<128x32xbf16, #tpu.memory_space<vmem>>, vector<128x32xbf16>
    %cst_10 = arith.constant dense<0.000000e+00> : vector<16x32xf32>
    %16 = tpu.matmul %14, %15, %cst_10 {dimension_numbers = #tpu.dot_dimension_numbers<[1], [0], [0], [1], [0, 0, 1, 1], [], []>} : vector<16x128xbf16>, vector<128x32xbf16>, vector<16x32xf32> -> vector<16x32xf32>
    %c0_11 = arith.constant 0 : index
    %c0_12 = arith.constant 0 : index
    %17 = vector.load %arg5[%c0_11, %c0_12] : memref<1x32xf32, #tpu.memory_space<vmem>>, vector<1x32xf32>
    %18 = vector.broadcast %17 : vector<1x32xf32> to vector<16x32xf32>
    %19 = arith.addf %16, %18 : vector<16x32xf32>
    %c0_13 = arith.constant 0 : index
    %c0_14 = arith.constant 0 : index
    %20 = vector.load %arg6[%c0_13, %c0_14] : memref<16x32xf32, #tpu.memory_space<vmem>>, vector<16x32xf32>
    tpu.vector_store %arg6[%c0_13, %c0_14], %19 {strides = array<i32>} : memref<16x32xf32, #tpu.memory_space<vmem>>, vector<16x32xf32>,
    return
  }
  func.func @transform_0(%arg0: i32) -> (i32, i32) {
    %c0_i32 = arith.constant 0 : i32
    %c0_i32_0 = arith.constant 0 : i32
    return %arg0, %c0_i32 : i32, i32
  }
  func.func @transform_1(%arg0: i32) -> (i32, i32) {
    %c0_i32 = arith.constant 0 : i32
    %c0_i32_0 = arith.constant 0 : i32
    %c0_i32_1 = arith.constant 0 : i32
    return %c0_i32, %c0_i32_0 : i32, i32
  }
  func.func @transform_2(%arg0: i32) -> (i32, i32) {
    %c0_i32 = arith.constant 0 : i32
    %c0_i32_0 = arith.constant 0 : i32
    %c0_i32_1 = arith.constant 0 : i32
    return %c0_i32, %c0_i32_0 : i32, i32
  }
  func.func @transform_3(%arg0: i32) -> (i32, i32) {
    %c0_i32 = arith.constant 0 : i32
    %c0_i32_0 = arith.constant 0 : i32
    %c0_i32_1 = arith.constant 0 : i32
    return %c0_i32, %c0_i32_0 : i32, i32
  }
  func.func @transform_4(%arg0: i32) -> (i32, i32) {
    %c0_i32 = arith.constant 0 : i32
    %c0_i32_0 = arith.constant 0 : i32
    %c0_i32_1 = arith.constant 0 : i32
    return %c0_i32, %c0_i32_0 : i32, i32
  }
  func.func @transform_5(%arg0: i32) -> (i32, i32) {
    %c0_i32 = arith.constant 0 : i32
    %c0_i32_0 = arith.constant 0 : i32
    return %arg0, %c0_i32 : i32, i32
  }
}

</mosaic_0001>

<llo_original>
// kernel: mlp_forward.1
$region0: #{mlp_forward.1}
  #allocation0 [shape = 'u32[]', space=smem, size = 0x4, offset = 0x4, fixed_abs, tag = 'smem constant byte address 0x4 - core index']
  #allocation1 [shape = 'u32[72,128]{1,0:T(1,128)}', space=vmem, size = 0x9000, scoped, tag = 'internal scratch']
  %s0 = inlined_call_operand.vmem [shape: bf16[16,32], index: 0, kind: input, shape index: {}]
  %s1 = inlined_call_operand.vmem [shape: bf16[32,128], index: 1, kind: input, shape index: {}]
  %s2 = inlined_call_operand.vmem [shape: f32[1,128], index: 2, kind: input, shape index: {}]
  %s3 = inlined_call_operand.vmem [shape: bf16[128,32], index: 3, kind: input, shape index: {}]
  %s4 = inlined_call_operand.vmem [shape: f32[1,32], index: 4, kind: input, shape index: {}]
  %s5 = inlined_call_operand.hbm [shape: f32[16,32], index: 5, kind: output, shape index: {}]
  %s6 = sld [smem:[#allocation0]]
  $region30: #{mlp_forward.1} parent=0
    _
  %s8 = ssub.s32 1, %s6
  %s9 = scalar_select 0, %s8, %s6
  $region1: #{mlp_forward.1} parent=0
    #allocation2 [shape = 'u8[8192]{0}', space=vmem, size = 0x2000, scoped, tag = 'output window, operand 0, single buffered']
    #allocation3 [shape = 's32[1]{0}', space=sflag, size = 0x4, scoped, tag = 'scoped memory for mlp_forward.1']
    %10 = vsyncpa [#allocation3], 0
    // Predicated region
    $region2: #{mlp_forward.1} parent=1 // pred_check
      _
    $region3: #{mlp_forward.1} parent=1 // pred_check_branch
      %12 = sbr.rel (0) target = $region5
    $region4: #{mlp_forward.1} parent=1 // pred_region
      _
    $region5: #{mlp_forward.1} parent=1 // pred_fallthru
      _
    // Predicated region
    $region6: #{mlp_forward.1} parent=1 // pred_check
      _
    $region7: #{mlp_forward.1} parent=1 // pred_check_branch
      %14 = sbr.rel (0) target = $region9
    $region8: #{mlp_forward.1} parent=1 // pred_region
      _
    $region9: #{mlp_forward.1} parent=1 // pred_fallthru
      _
    // Predicated region
    $region10: #{mlp_forward.1} parent=1 // pred_check
      _
    $region11: #{mlp_forward.1} parent=1 // pred_check_branch
      %16 = sbr.rel (0) target = $region13
    $region12: #{mlp_forward.1} parent=1 // pred_region
      _
    $region13: #{mlp_forward.1} parent=1 // pred_fallthru
      _
    // Predicated region
    $region14: #{mlp_forward.1} parent=1 // pred_check
      _
    $region15: #{mlp_forward.1} parent=1 // pred_check_branch
      %18 = sbr.rel (0) target = $region17
    $region16: #{mlp_forward.1} parent=1 // pred_region
      _
    $region17: #{mlp_forward.1} parent=1 // pred_fallthru
      _
    // Predicated region
    $region18: #{mlp_forward.1} parent=1 // pred_check
      _
    $region19: #{mlp_forward.1} parent=1 // pred_check_branch
      %20 = sbr.rel (0) target = $region21
    $region20: #{mlp_forward.1} parent=1 // pred_region
      _
    $region21: #{mlp_forward.1} parent=1 // pred_fallthru
      _
    %v22 = vld [vmem:[%s0] sm:$0xf]
    %v23 = vld [vmem:[%s0 + $0x4] sm:$0xf]
    %v24 = vld [vmem:[%s1] sm:$0xf]
    %v25 = vld [vmem:[%s1 + $0x4] sm:$0xf]
    %v26 = vld [vmem:[%s1 + $0x8] sm:$0xf]
    %v27 = vld [vmem:[%s1 + $0xc] sm:$0xf]
    %v28 = vld [vmem:[%s2] sm:$0x1]
    %v30 = vperm.slane %v28, 0
    %v34 = vunpack.c.l.b16 %v22
    %v35 = vunpack.c.l.b16 %v23
    %v36 = vpack.c.b16 %v35, %v34
    %v41 = vunpack.c.l.b16 %v24
    %v42 = vunpack.c.l.b16 %v25
    %v43 = vunpack.c.l.b16 %v26
    %v44 = vunpack.c.l.b16 %v27
    %v45 = vpack.c.b16 %v42, %v41
    %v46 = vpack.c.b16 %v44, %v43
    %vm49 = vcmask 261120
    %v51 = vsel %vm49, %v36, 0
    %53 = vmatpush.bf16.msra.mxu0 0
    %54 = vmatpush.bf16.msra.mxu0 0
    %55 = vmatpush.bf16.msra.mxu0 0
    %56 = vmatpush.bf16.msra.mxu0 0
    %57 = vmatpush.bf16.msra.mxu0 0
    %58 = vmatpush.bf16.msra.mxu0 0
    %59 = vmatpush.bf16.msra.mxu0 %v46
    %60 = vmatpush.bf16.msra.mxu0 %v45
    %61 = vmatmul.bf16.gmra.mxu0 %v51
    %v62 = vpop.f32.mrf.mxu0
    %v63 = vadd.f32 %v30, %v62
    %v64 = vpop.f32.mrf.mxu0
    %v65 = vadd.f32 %v30, %v64
    %66 = vdwg.mxu0
    %v67 = vmul.f32 %v63, 0.5
    %v68 = vmul.f32 %v65, 0.5
    %v69 = vmul.f32 %v63, 0.70710677
    %v70 = vmul.f32 %v65, 0.70710677
    %v71 = vmul.f32 %v69, %v69
    %v72 = vmin.f32 16.0, %v71
    %v73 = vmul.f32 %v72, 2.1237322e-06
    %v74 = vadd.f32 %v73, 0.00028619796
    %v75 = vmul.f32 %v72, %v74
    %v76 = vadd.f32 %v75, 0.0036580483
    %v77 = vmul.f32 %v72, %v76
    %v78 = vadd.f32 %v77, 0.05243302
    %v79 = vmul.f32 %v72, %v78
    %v80 = vadd.f32 %v79, 0.18741608
    %v81 = vmul.f32 %v72, %v80
    %v82 = vadd.f32 %v81, 1.1283791
    %v83 = vmul.f32 %v69, %v82
    %v84 = vmul.f32 %v72, 3.8918573e-05
    %v85 = vadd.f32 %v84, 0.001143296
    %v86 = vmul.f32 %v72, %v85
    %v87 = vadd.f32 %v86, 0.014752088
    %v88 = vmul.f32 %v72, %v87
    %v89 = vadd.f32 %v88, 0.112945676
    %v90 = vmul.f32 %v72, %v89
    %v91 = vadd.f32 %v90, 0.4994258
    %v92 = vmul.f32 %v72, %v91
    %v93 = vadd.f32 %v92, 1.0
    %v94 = vrcp.pop %v93
    %v95 = vmul.f32 %v93, %v94
    %v96 = vsub.f32 1.0, %v95
    %v97 = vmul.f32 %v94, %v96
    %v98 = vadd.f32 %v94, %v97
    %vm99 = vweird.f32 %v93
    %vm100 = vweird.f32 %v94
    %vm101 = vmor %vm99, %vm100
    %v102 = vsel %vm101, %v94, %v98
    %v103 = vand.u32 2147483647, %v93
    %vm104 = vcmp.eq.f32.partialorder %v103, 8.507059e+37
    %v105 = vand.u32 %v93, 2147483648
    %v106 = vor.u32 1.1754944e-38, %v105
    %v107 = vsel %vm104, %v106, %v102
    %v108 = vmul.f32 %v83, %v107
    %v109 = vmin.f32 %v108, 1.0
    %v110 = vmax.f32 %v109, -1.0
    %v111 = vmul.f32 %v70, %v70
    %v112 = vmin.f32 16.0, %v111
    %v113 = vmul.f32 %v112, 2.1237322e-06
    %v114 = vadd.f32 %v113, 0.00028619796
    %v115 = vmul.f32 %v112, %v114
    %v116 = vadd.f32 %v115, 0.0036580483
    %v117 = vmul.f32 %v112, %v116
    %v118 = vadd.f32 %v117, 0.05243302
    %v119 = vmul.f32 %v112, %v118
    %v120 = vadd.f32 %v119, 0.18741608
    %v121 = vmul.f32 %v112, %v120
    %v122 = vadd.f32 %v121, 1.1283791
    %v123 = vmul.f32 %v70, %v122
    %v124 = vmul.f32 %v112, 3.8918573e-05
    %v125 = vadd.f32 %v124, 0.001143296
    %v126 = vmul.f32 %v112, %v125
    %v127 = vadd.f32 %v126, 0.014752088
    %v128 = vmul.f32 %v112, %v127
    %v129 = vadd.f32 %v128, 0.112945676
    %v130 = vmul.f32 %v112, %v129
    %v131 = vadd.f32 %v130, 0.4994258
    %v132 = vmul.f32 %v112, %v131
    %v133 = vadd.f32 %v132, 1.0
    %v134 = vrcp.pop %v133
    %v135 = vmul.f32 %v133, %v134
    %v136 = vsub.f32 1.0, %v135
    %v137 = vmul.f32 %v134, %v136
    %v138 = vadd.f32 %v134, %v137
    %vm139 = vweird.f32 %v133
    %vm140 = vweird.f32 %v134
    %vm141 = vmor %vm139, %vm140
    %v142 = vsel %vm141, %v134, %v138
    %v143 = vand.u32 2147483647, %v133
    %vm144 = vcmp.eq.f32.partialorder %v143, 8.507059e+37
    %v145 = vand.u32 %v133, 2147483648
    %v146 = vor.u32 1.1754944e-38, %v145
    %v147 = vsel %vm144, %v146, %v142
    %v148 = vmul.f32 %v123, %v147
    %v149 = vmin.f32 %v148, 1.0
    %v150 = vmax.f32 %v149, -1.0
    %v151 = vadd.f32 %v110, 1.0
    %v152 = vadd.f32 %v150, 1.0
    %v153 = vmul.f32 %v67, %v151
    %v154 = vmul.f32 %v68, %v152
    %v155 = vpack.c.bf16 %v154, %v153
    %v156 = vld [vmem:[%s3] sm:$0xf]
    %v157 = vld [vmem:[%s3 + $0x4] sm:$0xf]
    %v158 = vld [vmem:[%s3 + $0x8] sm:$0xf]
    %v159 = vld [vmem:[%s3 + $0xc] sm:$0xf]
    %v160 = vld [vmem:[%s3 + $0x10] sm:$0xf]
    %v161 = vld [vmem:[%s3 + $0x14] sm:$0xf]
    %v162 = vld [vmem:[%s3 + $0x18] sm:$0xf]
    %v163 = vld [vmem:[%s3 + $0x1c] sm:$0xf]
    %v164 = vld [vmem:[%s3 + $0x20] sm:$0xf]
    %v165 = vld [vmem:[%s3 + $0x24] sm:$0xf]
    %v166 = vld [vmem:[%s3 + $0x28] sm:$0xf]
    %v167 = vld [vmem:[%s3 + $0x2c] sm:$0xf]
    %v168 = vld [vmem:[%s3 + $0x30] sm:$0xf]
    %v169 = vld [vmem:[%s3 + $0x34] sm:$0xf]
    %v170 = vld [vmem:[%s3 + $0x38] sm:$0xf]
    %v171 = vld [vmem:[%s3 + $0x3c] sm:$0xf]
    %v172 = vld [vmem:[%s4] sm:$0x1]
    %v174 = vperm.slane %v172, 0
    %v192 = vunpack.c.l.b16 %v156
    %v193 = vunpack.c.l.b16 %v157
    %v194 = vunpack.c.l.b16 %v158
    %v195 = vunpack.c.l.b16 %v159
    %v196 = vunpack.c.l.b16 %v160
    %v197 = vunpack.c.l.b16 %v161
    %v198 = vunpack.c.l.b16 %v162
    %v199 = vunpack.c.l.b16 %v163
    %v200 = vunpack.c.l.b16 %v164
    %v201 = vunpack.c.l.b16 %v165
    %v202 = vunpack.c.l.b16 %v166
    %v203 = vunpack.c.l.b16 %v167
    %v204 = vunpack.c.l.b16 %v168
    %v205 = vunpack.c.l.b16 %v169
    %v206 = vunpack.c.l.b16 %v170
    %v207 = vunpack.c.l.b16 %v171
    %v208 = vpack.c.b16 %v193, %v192
    %v209 = vpack.c.b16 %v195, %v194
    %v210 = vpack.c.b16 %v197, %v196
    %v211 = vpack.c.b16 %v199, %v198
    %v212 = vpack.c.b16 %v201, %v200
    %v213 = vpack.c.b16 %v203, %v202
    %v214 = vpack.c.b16 %v205, %v204
    %v215 = vpack.c.b16 %v207, %v206
    %224 = vmatpush.bf16.msra.mxu0 %v215
    %225 = vmatpush.bf16.msra.mxu0 %v214
    %226 = vmatpush.bf16.msra.mxu0 %v213
    %227 = vmatpush.bf16.msra.mxu0 %v212
    %228 = vmatpush.bf16.msra.mxu0 %v211
    %229 = vmatpush.bf16.msra.mxu0 %v210
    %230 = vmatpush.bf16.msra.mxu0 %v209
    %231 = vmatpush.bf16.msra.mxu0 %v208
    %232 = vmatmul.bf16.gmra.mxu0 %v155
    %v233 = vpop.f32.mrf.mxu0
    %v234 = vadd.f32 %v174, %v233
    %v235 = vpop.f32.mrf.mxu0
    %v236 = vadd.f32 %v174, %v235
    %237 = vdwg.mxu0
    %238 = vst.msk [vmem:[#allocation2] sm:$0xff] %vm49, %v234
    %239 = vst.msk [vmem:[#allocation2 + $0x8] sm:$0xff] %vm49, %v236
    // Predicated region
    $region22: #{mlp_forward.1} parent=1 // pred_check
      _
    $region23: #{mlp_forward.1} parent=1 // pred_check_branch
      %241 = sbr.rel (0) target = $region25
    $region24: #{mlp_forward.1} parent=1 // pred_region
      %243 = vsyncadd [#allocation3], 0
      %s244 = sshll.u32 [#allocation2], 4
      %s245 = int_to_ptr.vmem [resolvable:$true] %s244
      %s246 = sshll.u32 %s5, 4
      %s247 = int_to_ptr.hbm [resolvable:$true] %s246
      %252 = dma.vmem_to_hbm [thread:$0]  %s245, 256, %s247, [#allocation3], 128, 128, 8
    $region25: #{mlp_forward.1} parent=1 // pred_fallthru
      _
    // Predicated region
    $region26: #{mlp_forward.1} parent=1 // pred_check
      _
    $region27: #{mlp_forward.1} parent=1 // pred_check_branch
      %254 = sbr.rel (0) target = $region29
    $region28: #{mlp_forward.1} parent=1 // pred_region
      %256 = dma.done [#allocation3], 256
    $region29: #{mlp_forward.1} parent=1 // pred_fallthru
      _
    %257 = vsyncpa [#allocation3], 1

</llo_original>
